<compile_context>
chip_gen: v5e
topology: v5e:2x2
jax: 0.10.0
libtpu: 0.0.40
codegen_flags: <defaults>
</compile_context>

<pallas_src>
import math

import jax
import jax.numpy as jnp
from jax.experimental import pallas as pl
from jax.experimental.pallas import tpu as pltpu


# ----------------------------------------------------------------------------- #
# PE table (deterministic glue, computed once in plain JAX = registered buffer)
# ----------------------------------------------------------------------------- #
def _build_pe_table(d_model: int, max_len: int = 5000, dtype=jnp.float32):
    """Sinusoidal PE table, identical to the PyTorch buffer (pre-cast to model dtype)."""
    assert d_model % 2 == 0, "PositionalEncoding requires an even d_model"
    position = jnp.arange(0.0, max_len, dtype=jnp.float32)[:, None]           # (max_len, 1)
    div_term = jnp.exp(
        jnp.arange(0.0, d_model, 2.0, dtype=jnp.float32)
        * (-(math.log(10000.0) / d_model))
    )                                                                          # (d_model/2,)
    angles = position * div_term                                               # (max_len, d_model/2)
    pe = jnp.stack([jnp.sin(angles), jnp.cos(angles)], axis=-1)                # even=sin, odd=cos
    return pe.reshape(max_len, d_model).astype(dtype)                          # (max_len, d_model)


# ----------------------------------------------------------------------------- #
# Kernel: elementwise add of an x tile and the matching PE tile (broadcasts over
# the leading axis when the whole problem is a single block).
# ----------------------------------------------------------------------------- #
def _pe_add_kernel(x_ref, pe_ref, o_ref):
    o_ref[...] = x_ref[...] + pe_ref[...]


# ----------------------------------------------------------------------------- #
# Wrapper
# ----------------------------------------------------------------------------- #
_TILE_BYTES = 6 * 1024 * 1024        # per-buffer tile budget (6 double-buffered bufs ~= 36 MiB)
_VMEM_LIMIT = 48 * 1024 * 1024       # explicit scoped-VMEM limit, safe under v7x 64 MiB physical


@jax.jit
def positional_encoding_forward(x, pe_full):
    """x: (B, S, D); pe_full: (max_len, D) in x.dtype. Returns x + pe[:S] (eval dropout)."""
    B, S, D = x.shape
    pe = pe_full[:S]
    if pe.dtype != x.dtype:            # no-op when the table was pre-cast at init
        pe = pe.astype(x.dtype)

    itemsize = jnp.dtype(x.dtype).itemsize
    sub = max(8, 32 // itemsize)       # sublane packing multiple: f32->8, bf16->16, int8/fp8->32

    # --- choose a lane-dense layout (every vst full 128-lane width) -----------------
    d_pad = 0
    if D % 128 == 0:
        rows_total, row_width = S, D
        x_k = x
        pe_k = pe[None, :, :]
    elif (S * D) % 128 == 0:
        # Repack each batch element row-major into full-width lane rows; prefer wider
        # rows (longer contiguous DMA runs, fewer descriptors).
        row_width = 128
        for w in (512, 256):
            if (S * D) % w == 0:
                row_width = w
                break
        rows_total = (S * D) // row_width
        x_k = x.reshape(B, rows_total, row_width)
        pe_k = pe.reshape(1, rows_total, row_width)
    else:
        # Irregular D: pad the feature dim up to a multiple of 128 so stores stay
        # unmasked; padding is sliced off after the kernel.
        d_pad = ((D + 127) // 128) * 128 - D
        rows_total, row_width = S, D + d_pad
        x_k = jnp.pad(x, ((0, 0), (0, 0), (0, d_pad)))
        pe_k = jnp.pad(pe, ((0, 0), (0, d_pad)))[None, :, :]

    ce = pl.CostEstimate(
        flops=B * rows_total * row_width,
        transcendentals=0,
        bytes_accessed=(2 * B + 1) * rows_total * row_width * itemsize,  # PE read once
    )

    total_bytes = B * rows_total * row_width * itemsize
    if total_bytes <= _TILE_BYTES:
        # Tiny problem: one block, one grid step (per-step overhead would dominate).
        out = pl.pallas_call(
            _pe_add_kernel,
            out_shape=jax.ShapeDtypeStruct(x_k.shape, x.dtype),
            grid_spec=pltpu.PrefetchScalarGridSpec(
                num_scalar_prefetch=0,
                grid=(1,),
                in_specs=[
                    pl.BlockSpec((B, rows_total, row_width), lambda i: (0, 0, 0)),
                    pl.BlockSpec((1, rows_total, row_width), lambda i: (0, 0, 0)),
                ],
                out_specs=pl.BlockSpec((B, rows_total, row_width), lambda i: (0, 0, 0)),
            ),
            compiler_params=pltpu.CompilerParams(
                dimension_semantics=("arbitrary",),
                vmem_limit_bytes=_VMEM_LIMIT,
            ),
            cost_estimate=ce,
        )(x_k, pe_k)
    else:
        # --- pick a row tile: fits the VMEM budget, multiple of the packing factor,
        #     and (when possible) an exact divisor of rows_total (no masked tail).
        max_rows = max(sub, _TILE_BYTES // max(1, row_width * itemsize))
        if max_rows >= rows_total:
            tr = rows_total
        else:
            tr = max(sub, (max_rows // sub) * sub)
            if rows_total % tr != 0:
                for t in range(tr, max(sub, tr // 2) - 1, -sub):
                    if rows_total % t == 0:
                        tr = t
                        break

        # B innermost: PE block index (0, s, 0) is constant across the inner sweep,
        # so Pallas skips re-fetching the PE tile for every batch element.
        grid = (pl.cdiv(rows_total, tr), B)
        out = pl.pallas_call(
            _pe_add_kernel,
            out_shape=jax.ShapeDtypeStruct(x_k.shape, x.dtype),
            grid_spec=pltpu.PrefetchScalarGridSpec(
                num_scalar_prefetch=0,
                grid=grid,
                in_specs=[
                    pl.BlockSpec((1, tr, row_width), lambda s, b: (b, s, 0)),   # x tile
                    pl.BlockSpec((1, tr, row_width), lambda s, b: (0, s, 0)),   # pe tile (reused)
                ],
                out_specs=pl.BlockSpec((1, tr, row_width), lambda s, b: (b, s, 0)),
            ),
            compiler_params=pltpu.CompilerParams(
                # row-tile axis shards across v7x's 2 cores; B stays sequential per core
                dimension_semantics=("parallel", "arbitrary"),
                vmem_limit_bytes=_VMEM_LIMIT,
            ),
            cost_estimate=ce,
        )(x_k, pe_k)

    if d_pad:
        return out[:, :, :D]
    return out.reshape(B, S, D)


# ----------------------------------------------------------------------------- #
# Demo / correctness checks
# ----------------------------------------------------------------------------- #
if __name__ == "__main__":
    MAX_LEN = 5000
    key = jax.random.PRNGKey(0)
    k1, k2 = jax.random.split(key)

    # Primary module-consistent small check: batch=2, seq=8, d_model=32 (single-block path).
    B, S, D = 2, 8, 32
    x = jax.random.normal(key, (B, S, D), dtype=jnp.float32)
    pe_full = _build_pe_table(D, max_len=MAX_LEN, dtype=jnp.float32)
    out = jax.block_until_ready(positional_encoding_forward(x, pe_full))
    ref = x + pe_full[:S][None, :, :]
    assert out.shape == (B, S, D)
    assert jnp.allclose(out, ref, atol=1e-6), "mismatch vs reference (small path)"

    # Secondary check: exercises the tiled grid (row tiles outer, batch inner, PE reuse).
    B2, S2, D2 = 2, 4096, 1024
    x2 = jax.random.normal(k1, (B2, S2, D2), dtype=jnp.float32)
    pe_full2 = _build_pe_table(D2, max_len=MAX_LEN, dtype=jnp.float32)
    out2 = jax.block_until_ready(positional_encoding_forward(x2, pe_full2))
    ref2 = x2 + pe_full2[:S2][None, :, :]
    assert jnp.allclose(out2, ref2, atol=1e-6), "mismatch vs reference (tiled path)"

    # Third check: irregular d_model -> pad-to-128 fallback keeps stores full-width.
    B3, S3, D3 = 2, 7, 40
    x3 = jax.random.normal(k2, (B3, S3, D3), dtype=jnp.float32)
    pe_full3 = _build_pe_table(D3, max_len=MAX_LEN, dtype=jnp.float32)
    out3 = jax.block_until_ready(positional_encoding_forward(x3, pe_full3))
    ref3 = x3 + pe_full3[:S3][None, :, :]
    assert jnp.allclose(out3, ref3, atol=1e-6), "mismatch vs reference (padded path)"

    print("KERNEL_OK")
</pallas_src>

<mosaic_0001>
module attributes {stable_mosaic.version = 11 : i64} {
  func.func @_pe_add_kernel(%arg0: i32, %arg1: memref<2x1x256xf32, #tpu.memory_space<vmem>>, %arg2: memref<1x1x256xf32, #tpu.memory_space<vmem>>, %arg3: memref<2x1x256xf32, #tpu.memory_space<vmem>>) attributes {dimension_semantics = [#tpu.dimension_semantics<arbitrary>], iteration_bounds = array<i64: 1>, scalar_prefetch = 0 : i64, scratch_operands = 0 : i64, tpu.core_type = #tpu.core_type<tc>, window_params = [{pipeline_mode = #tpu.pipeline_mode<synchronous>, transform_indices = @transform_0, window_bounds = array<i64: 2, 1, 256>}, {pipeline_mode = #tpu.pipeline_mode<synchronous>, transform_indices = @transform_1, window_bounds = array<i64: 1, 1, 256>}, {pipeline_mode = #tpu.pipeline_mode<synchronous>, transform_indices = @transform_2, window_bounds = array<i64: 2, 1, 256>}]} {
    %c0 = arith.constant 0 : index
    %c0_0 = arith.constant 0 : index
    %c0_1 = arith.constant 0 : index
    %0 = vector.load %arg1[%c0, %c0_0, %c0_1] : memref<2x1x256xf32, #tpu.memory_space<vmem>>, vector<2x1x256xf32>
    %c0_2 = arith.constant 0 : index
    %c0_3 = arith.constant 0 : index
    %c0_4 = arith.constant 0 : index
    %1 = vector.load %arg2[%c0_2, %c0_3, %c0_4] : memref<1x1x256xf32, #tpu.memory_space<vmem>>, vector<1x1x256xf32>
    %2 = vector.broadcast %1 : vector<1x1x256xf32> to vector<2x1x256xf32>
    %3 = arith.addf %0, %2 : vector<2x1x256xf32>
    %c0_5 = arith.constant 0 : index
    %c0_6 = arith.constant 0 : index
    %c0_7 = arith.constant 0 : index
    %4 = vector.load %arg3[%c0_5, %c0_6, %c0_7] : memref<2x1x256xf32, #tpu.memory_space<vmem>>, vector<2x1x256xf32>
    tpu.vector_store %arg3[%c0_5, %c0_6, %c0_7], %3 {strides = array<i32>} : memref<2x1x256xf32, #tpu.memory_space<vmem>>, vector<2x1x256xf32>,
    return
  }
  func.func @transform_0(%arg0: i32) -> (i32, i32, i32) {
    %c0_i32 = arith.constant 0 : i32
    %c0_i32_0 = arith.constant 0 : i32
    %c0_i32_1 = arith.constant 0 : i32
    %c0_i32_2 = arith.constant 0 : i32
    return %c0_i32, %c0_i32_0, %c0_i32_1 : i32, i32, i32
  }
  func.func @transform_1(%arg0: i32) -> (i32, i32, i32) {
    %c0_i32 = arith.constant 0 : i32
    %c0_i32_0 = arith.constant 0 : i32
    %c0_i32_1 = arith.constant 0 : i32
    %c0_i32_2 = arith.constant 0 : i32
    return %c0_i32, %c0_i32_0, %c0_i32_1 : i32, i32, i32
  }
  func.func @transform_2(%arg0: i32) -> (i32, i32, i32) {
    %c0_i32 = arith.constant 0 : i32
    %c0_i32_0 = arith.constant 0 : i32
    %c0_i32_1 = arith.constant 0 : i32
    %c0_i32_2 = arith.constant 0 : i32
    return %c0_i32, %c0_i32_0, %c0_i32_1 : i32, i32, i32
  }
}

</mosaic_0001>

<llo_original>
// kernel: positional_encoding_forward.1
$region0: #{positional_encoding_forward.1}
  #allocation0 [shape = 'u32[]', space=smem, size = 0x4, offset = 0x4, fixed_abs, tag = 'smem constant byte address 0x4 - core index']
  #allocation1 [shape = 'u32[72,128]{1,0:T(1,128)}', space=vmem, size = 0x9000, scoped, tag = 'internal scratch']
  %s0 = inlined_call_operand.vmem [shape: f32[2,1,256], index: 0, kind: input, shape index: {}]
  %s1 = inlined_call_operand.vmem [shape: f32[1,1,256], index: 1, kind: input, shape index: {}]
  %s2 = inlined_call_operand.vmem [shape: f32[2,1,256], index: 2, kind: output, shape index: {}]
  %s3 = sld [smem:[#allocation0]]
  $region18: #{positional_encoding_forward.1} parent=0
    _
  %s5 = ssub.s32 1, %s3
  %s6 = scalar_select 0, %s5, %s3
  // Predicated region
  $region2: #{positional_encoding_forward.1} parent=0 // pred_check
    _
  $region3: #{positional_encoding_forward.1} parent=0 // pred_check_branch
    %8 = sbr.rel (0) target = $region5
  $region4: #{positional_encoding_forward.1} parent=0 // pred_region
    _
  $region5: #{positional_encoding_forward.1} parent=0 // pred_fallthru
    _
  // Predicated region
  $region6: #{positional_encoding_forward.1} parent=0 // pred_check
    _
  $region7: #{positional_encoding_forward.1} parent=0 // pred_check_branch
    %10 = sbr.rel (0) target = $region9
  $region8: #{positional_encoding_forward.1} parent=0 // pred_region
    _
  $region9: #{positional_encoding_forward.1} parent=0 // pred_fallthru
    _
  %v11 = vld [vmem:[%s0] sm:$0x3]
  %v12 = vld [vmem:[%s0 + $0x2] sm:$0x3]
  %v13 = vld [vmem:[%s1] sm:$0x3]
  %v14 = vadd.f32 %v11, %v13
  %v15 = vadd.f32 %v12, %v13
  %v16 = vlaneseq
  %vm17 = vcmp.ge.s32.totalorder %v16, 0
  %vm18 = vcmp.lt.s32.totalorder %v16, 256
  %vm19 = vmand %vm17, %vm18
  %20 = vst.msk [vmem:[%s2] sm:$0x3] %vm19, %v14
  %21 = vst.msk [vmem:[%s2 + $0x2] sm:$0x3] %vm19, %v15
  // Predicated region
  $region10: #{positional_encoding_forward.1} parent=0 // pred_check
    _
  $region11: #{positional_encoding_forward.1} parent=0 // pred_check_branch
    %23 = sbr.rel (0) target = $region13
  $region12: #{positional_encoding_forward.1} parent=0 // pred_region
    _
  $region13: #{positional_encoding_forward.1} parent=0 // pred_fallthru
    _
  // Predicated region
  $region14: #{positional_encoding_forward.1} parent=0 // pred_check
    _
  $region15: #{positional_encoding_forward.1} parent=0 // pred_check_branch
    %25 = sbr.rel (0) target = $region17
  $region16: #{positional_encoding_forward.1} parent=0 // pred_region
    _
  $region17: #{positional_encoding_forward.1} parent=0 // pred_fallthru
    _

</llo_original>
